<compile_context>
chip_gen: v7x
topology: tpu7x:2x2x1
jax: 0.10.0
libtpu: 0.0.40
codegen_flags: <defaults>
</compile_context>

<pallas_src>
import jax
import jax.numpy as jnp
from jax.experimental import pallas as pl
from jax.experimental.pallas import tpu as pltpu


def _fused_head_kernel(x_ref, wf_ref, bf_ref, o_ref):
    # One MXU push per (tm, 3E) batch tile; f32 accumulate, bias add on VPU.
    o_ref[...] = (
        jnp.dot(x_ref[...], wf_ref[...], preferred_element_type=jnp.float32)
        + bf_ref[...]
    ).astype(o_ref.dtype)


def _round_up(x, m):
    return ((x + m - 1) // m) * m


def mul_module_early_forward(ehr_embed, cxr_embed, note_embed,
                             w1, b1, w2, b2, *, block_rows=512):
    """'early' mode forward of Mul_module (modality='ecn').

    ehr_embed, cxr_embed, note_embed : (B, E)
    w1 : (3*E, E), b1 : (E,)   -- first Linear of the cls_head Sequential
    w2 : (E, 2),  b2 : (2,)    -- second Linear of the cls_head Sequential
                                  (weights stored as (in, out), i.e. the
                                  transpose of torch.nn.Linear.weight)
    returns (B, 2)
    """
    B, E = ehr_embed.shape
    assert w1.shape == (3 * E, E) and w2.shape == (E, 2)
    out_dtype = ehr_embed.dtype

    # --- static weight prep (glue code; hoistable / constant-foldable) -------
    # No activation between the Linears -> fold into one affine map.
    wf = (w1.astype(jnp.float32) @ w2.astype(jnp.float32))                # (3E, 2)
    bf = (b1.astype(jnp.float32) @ w2.astype(jnp.float32)
          + b2.astype(jnp.float32)).reshape(1, 2)                        # (1, 2)
    wf = wf.astype(out_dtype)  # bf16-friendly MXU input if embeds are bf16

    # concat([e, c, n], dim=1): one K=3E contraction keeps the MXU pipeline fed
    # instead of three K=E pushes.
    x = jnp.concatenate([ehr_embed, cxr_embed, note_embed], axis=1)       # (B, 3E)
    K = 3 * E

    # --- batch tiling --------------------------------------------------------
    tm = min(block_rows, _round_up(B, 8))   # rows per step, multiple of 8
    Bp = _round_up(B, tm)                   # pad so every block is full
    if Bp != B:
        x = jnp.pad(x, ((0, Bp - B), (0, 0)))

    out = pl.pallas_call(
        _fused_head_kernel,
        out_shape=jax.ShapeDtypeStruct((Bp, 2), out_dtype),
        grid=(pl.cdiv(Bp, tm),),
        in_specs=[
            pl.BlockSpec((tm, K), lambda i: (i, 0)),   # streamed batch tiles
            pl.BlockSpec((K, 2), lambda i: (0, 0)),    # folded weight, resident
            pl.BlockSpec((1, 2), lambda i: (0, 0)),    # folded bias, resident
        ],
        out_specs=pl.BlockSpec((tm, 2), lambda i: (i, 0)),
        compiler_params=pltpu.CompilerParams(
            dimension_semantics=("parallel",),   # 2-TC shard on v7x; no-op v5e/v6e
        ),
    )(x, wf, bf)

    return out[:B]


if __name__ == "__main__":
    key = jax.random.PRNGKey(0)
    B = 8           # batch
    E = 64          # embed_size (small, consistent with the module)
    n_mod = 3       # modality = 'ecn'

    k = jax.random.split(key, 7)
    ehr_embed = jax.random.normal(k[0], (B, E), dtype=jnp.float32)
    cxr_embed = jax.random.normal(k[1], (B, E), dtype=jnp.float32)
    note_embed = jax.random.normal(k[2], (B, E), dtype=jnp.float32)

    # Deterministic synthetic parameters (not a checkpoint).
    w1 = jax.random.normal(k[3], (n_mod * E, E), dtype=jnp.float32) * 0.02
    b1 = jax.random.normal(k[4], (E,), dtype=jnp.float32) * 0.01
    w2 = jax.random.normal(k[5], (E, 2), dtype=jnp.float32) * 0.02
    b2 = jax.random.normal(k[6], (2,), dtype=jnp.float32) * 0.01

    pred = mul_module_early_forward(ehr_embed, cxr_embed, note_embed,
                                    w1, b1, w2, b2)
    pred = jax.block_until_ready(pred)

    # Pure-JAX two-step reference (original Linear->Linear order).
    cat = jnp.concatenate([ehr_embed, cxr_embed, note_embed], axis=1)
    ref = (cat @ w1 + b1) @ w2 + b2
    assert pred.shape == (B, 2)
    assert jnp.allclose(pred, ref, atol=1e-4, rtol=1e-4)

    # Also exercise the padded / multi-step grid path (B not a multiple of 8).
    B2 = 50
    kk = jax.random.split(jax.random.PRNGKey(1), 3)
    e2 = jax.random.normal(kk[0], (B2, E), dtype=jnp.float32)
    c2 = jax.random.normal(kk[1], (B2, E), dtype=jnp.float32)
    n2 = jax.random.normal(kk[2], (B2, E), dtype=jnp.float32)
    pred2 = jax.block_until_ready(
        mul_module_early_forward(e2, c2, n2, w1, b1, w2, b2, block_rows=16))
    cat2 = jnp.concatenate([e2, c2, n2], axis=1)
    ref2 = (cat2 @ w1 + b1) @ w2 + b2
    assert pred2.shape == (B2, 2)
    assert jnp.allclose(pred2, ref2, atol=1e-4, rtol=1e-4)

    print("KERNEL_OK")
</pallas_src>

<mosaic_0001>
module attributes {stable_mosaic.version = 11 : i64} {
  func.func @_fused_head_kernel(%arg0: i32, %arg1: memref<8x192xf32, #tpu.memory_space<vmem>>, %arg2: memref<192x2xf32, #tpu.memory_space<vmem>>, %arg3: memref<1x2xf32, #tpu.memory_space<vmem>>, %arg4: memref<8x2xf32, #tpu.memory_space<vmem>>) attributes {dimension_semantics = [#tpu.dimension_semantics<parallel>], iteration_bounds = array<i64: 1>, scalar_prefetch = 0 : i64, scratch_operands = 0 : i64, tpu.core_type = #tpu.core_type<tc>, window_params = [{transform_indices = @transform_0, window_bounds = array<i64: 8, 192>}, {pipeline_mode = #tpu.pipeline_mode<synchronous>, transform_indices = @transform_1, window_bounds = array<i64: 192, 2>}, {pipeline_mode = #tpu.pipeline_mode<synchronous>, transform_indices = @transform_2, window_bounds = array<i64: 1, 2>}, {transform_indices = @transform_3, window_bounds = array<i64: 8, 2>}]} {
    %c0 = arith.constant 0 : index
    %c0_0 = arith.constant 0 : index
    %0 = vector.load %arg1[%c0, %c0_0] : memref<8x192xf32, #tpu.memory_space<vmem>>, vector<8x192xf32>
    %c0_1 = arith.constant 0 : index
    %c0_2 = arith.constant 0 : index
    %1 = vector.load %arg2[%c0_1, %c0_2] : memref<192x2xf32, #tpu.memory_space<vmem>>, vector<192x2xf32>
    %cst = arith.constant dense<0.000000e+00> : vector<8x2xf32>
    %2 = tpu.matmul %0, %1, %cst {dimension_numbers = #tpu.dot_dimension_numbers<[1], [0], [0], [1], [0, 0, 1, 1], [], []>} : vector<8x192xf32>, vector<192x2xf32>, vector<8x2xf32> -> vector<8x2xf32>
    %c0_3 = arith.constant 0 : index
    %c0_4 = arith.constant 0 : index
    %3 = vector.load %arg3[%c0_3, %c0_4] : memref<1x2xf32, #tpu.memory_space<vmem>>, vector<1x2xf32>
    %4 = vector.broadcast %3 : vector<1x2xf32> to vector<8x2xf32>
    %5 = arith.addf %2, %4 : vector<8x2xf32>
    %c0_5 = arith.constant 0 : index
    %c0_6 = arith.constant 0 : index
    %6 = vector.load %arg4[%c0_5, %c0_6] : memref<8x2xf32, #tpu.memory_space<vmem>>, vector<8x2xf32>
    tpu.vector_store %arg4[%c0_5, %c0_6], %5 {strides = array<i32>} : memref<8x2xf32, #tpu.memory_space<vmem>>, vector<8x2xf32>,
    return
  }
  func.func @transform_0(%arg0: i32) -> (i32, i32) {
    %c0_i32 = arith.constant 0 : i32
    %c0_i32_0 = arith.constant 0 : i32
    return %arg0, %c0_i32 : i32, i32
  }
  func.func @transform_1(%arg0: i32) -> (i32, i32) {
    %c0_i32 = arith.constant 0 : i32
    %c0_i32_0 = arith.constant 0 : i32
    %c0_i32_1 = arith.constant 0 : i32
    return %c0_i32, %c0_i32_0 : i32, i32
  }
  func.func @transform_2(%arg0: i32) -> (i32, i32) {
    %c0_i32 = arith.constant 0 : i32
    %c0_i32_0 = arith.constant 0 : i32
    %c0_i32_1 = arith.constant 0 : i32
    return %c0_i32, %c0_i32_0 : i32, i32
  }
  func.func @transform_3(%arg0: i32) -> (i32, i32) {
    %c0_i32 = arith.constant 0 : i32
    %c0_i32_0 = arith.constant 0 : i32
    return %arg0, %c0_i32 : i32, i32
  }
}

</mosaic_0001>

<llo_original>
// kernel: tpu_custom_call.1
$region0: #{tpu_custom_call.1}
  #allocation0 [shape = 'u32[]', space=smem, size = 0x4, offset = 0x4, fixed_abs, tag = 'smem constant byte address 0x4 - core index']
  #allocation1 [shape = 'u32[144,128]{1,0:T(1,128)}', space=vmem, size = 0x12000, scoped, tag = 'internal scratch']
  %s0 = inlined_call_operand.vmem [shape: f32[8,192], index: 0, kind: input, shape index: {}]
  %s1 = inlined_call_operand.vmem [shape: f32[192,2], index: 1, kind: input, shape index: {}]
  %s2 = inlined_call_operand.vmem [shape: f32[1,2], index: 2, kind: input, shape index: {}]
  %s3 = inlined_call_operand.vmem [shape: f32[8,2], index: 3, kind: output, shape index: {}]
  %s4 = sld [smem:[#allocation0]]
  $region22: #{tpu_custom_call.1} parent=0
    _
  %s6 = ssub.s32 1, %s4
  %s7 = scalar_select 0, %s6, %s4
  // Predicated region
  $region2: #{tpu_custom_call.1} parent=0 // pred_check
    _
  $region3: #{tpu_custom_call.1} parent=0 // pred_check_branch
    %9 = sbr.rel (0) target = $region5
  $region4: #{tpu_custom_call.1} parent=0 // pred_region
    _
  $region5: #{tpu_custom_call.1} parent=0 // pred_fallthru
    _
  // Predicated region
  $region6: #{tpu_custom_call.1} parent=0 // pred_check
    _
  $region7: #{tpu_custom_call.1} parent=0 // pred_check_branch
    %11 = sbr.rel (0) target = $region9
  $region8: #{tpu_custom_call.1} parent=0 // pred_region
    _
  $region9: #{tpu_custom_call.1} parent=0 // pred_fallthru
    _
  // Predicated region
  $region10: #{tpu_custom_call.1} parent=0 // pred_check
    _
  $region11: #{tpu_custom_call.1} parent=0 // pred_check_branch
    %13 = sbr.rel (0) target = $region13
  $region12: #{tpu_custom_call.1} parent=0 // pred_region
    _
  $region13: #{tpu_custom_call.1} parent=0 // pred_fallthru
    _
  %v14 = vld [vmem:[%s0] sm:$0xff]
  %v15 = vld [vmem:[%s0 + $0x8] sm:$0xff]
  %v16 = vld [vmem:[%s1] sm:$0xff]
  %v17 = vld [vmem:[%s1 + $0x8] sm:$0xff]
  %v18 = vld [vmem:[%s1 + $0x10] sm:$0xff]
  %v19 = vld [vmem:[%s1 + $0x18] sm:$0xff]
  %v20 = vld [vmem:[%s1 + $0x20] sm:$0xff]
  %v21 = vld [vmem:[%s1 + $0x28] sm:$0xff]
  %v22 = vld [vmem:[%s1 + $0x30] sm:$0xff]
  %v23 = vld [vmem:[%s1 + $0x38] sm:$0xff]
  %v24 = vld [vmem:[%s1 + $0x40] sm:$0xff]
  %v25 = vld [vmem:[%s1 + $0x48] sm:$0xff]
  %v26 = vld [vmem:[%s1 + $0x50] sm:$0xff]
  %v27 = vld [vmem:[%s1 + $0x58] sm:$0xff]
  %v28 = vld [vmem:[%s1 + $0x60] sm:$0xff]
  %v29 = vld [vmem:[%s1 + $0x68] sm:$0xff]
  %v30 = vld [vmem:[%s1 + $0x70] sm:$0xff]
  %v31 = vld [vmem:[%s1 + $0x78] sm:$0xff]
  %v32 = vld [vmem:[%s1 + $0x80] sm:$0xff]
  %v33 = vld [vmem:[%s1 + $0x88] sm:$0xff]
  %v34 = vld [vmem:[%s1 + $0x90] sm:$0xff]
  %v35 = vld [vmem:[%s1 + $0x98] sm:$0xff]
  %v36 = vld [vmem:[%s1 + $0xa0] sm:$0xff]
  %v37 = vld [vmem:[%s1 + $0xa8] sm:$0xff]
  %v38 = vld [vmem:[%s1 + $0xb0] sm:$0xff]
  %v39 = vld [vmem:[%s1 + $0xb8] sm:$0xff]
  %v40 = vld [vmem:[%s2] sm:$0x1]
  %v42 = vlaneseq
  %v43 = vshrl.u32 %v42, 7
  %v44 = vsub.s32 0, %v43
  %v45 = vrot.slane %v40, %v44
  %vm47 = vcmask 523264
  %v49 = vsel %vm47, %v15, 0
  %51 = vmatprep.subr.mxu0 0.0
  %52 = vmatpush1.msra.mxu0 %v16
  %53 = vmatprep.subr.mxu0 0.0
  %54 = vmatpush1.msra.mxu0 %v17
  %55 = vmatprep.subr.mxu0 0.0
  %56 = vmatpush1.msra.mxu0 %v18
  %57 = vmatprep.subr.mxu0 0.0
  %58 = vmatpush1.msra.mxu0 %v19
  %59 = vmatprep.subr.mxu0 0.0
  %60 = vmatpush1.msra.mxu0 %v20
  %61 = vmatprep.subr.mxu0 0.0
  %62 = vmatpush1.msra.mxu0 %v21
  %63 = vmatprep.subr.mxu0 0.0
  %64 = vmatpush1.msra.mxu0 %v22
  %65 = vmatprep.subr.mxu0 0.0
  %66 = vmatpush1.msra.mxu0 %v23
  %67 = vmatprep.subr.mxu0 0.0
  %68 = vmatpush1.msra.mxu0 %v24
  %69 = vmatprep.subr.mxu0 0.0
  %70 = vmatpush1.msra.mxu0 %v25
  %71 = vmatprep.subr.mxu0 0.0
  %72 = vmatpush1.msra.mxu0 %v26
  %73 = vmatprep.subr.mxu0 0.0
  %74 = vmatpush1.msra.mxu0 %v27
  %75 = vmatprep.subr.mxu0 0.0
  %76 = vmatpush1.msra.mxu0 %v28
  %77 = vmatprep.subr.mxu0 0.0
  %78 = vmatpush1.msra.mxu0 %v29
  %79 = vmatprep.subr.mxu0 0.0
  %80 = vmatpush1.msra.mxu0 %v30
  %81 = vmatprep.subr.mxu0 0.0
  %82 = vmatpush1.msra.mxu0 %v31
  %83 = vmatprep.subr.mxu0 0.0
  %84 = vmatpush1.msra.mxu0 %v32
  %85 = vmatprep.subr.mxu0 0.0
  %86 = vmatpush1.msra.mxu0 %v33
  %87 = vmatprep.subr.mxu0 0.0
  %88 = vmatpush1.msra.mxu0 %v34
  %89 = vmatprep.subr.mxu0 0.0
  %90 = vmatpush1.msra.mxu0 %v35
  %91 = vmatprep.subr.mxu0 0.0
  %92 = vmatpush1.msra.mxu0 %v36
  %93 = vmatprep.subr.mxu0 0.0
  %94 = vmatpush1.msra.mxu0 %v37
  %95 = vmatprep.subr.mxu0 0.0
  %96 = vmatpush1.msra.mxu0 %v38
  %97 = vmatprep.subr.mxu0 0.0
  %98 = vmatpush1.msra.mxu0 %v39
  %99 = vmatprep.subr.mxu0 0.0
  %100 = vmatpush1.msra.mxu0 0.0
  %101 = vmatprep.subr.mxu0 0.0
  %102 = vmatpush1.msra.mxu0 0.0
  %103 = vmatprep.subr.mxu0 0.0
  %104 = vmatpush1.msra.mxu0 0.0
  %105 = vmatprep.subr.mxu0 0.0
  %106 = vmatpush1.msra.mxu0 0.0
  %107 = vmatprep.subr.mxu0 0.0
  %108 = vmatpush1.msra.mxu0 0.0
  %109 = vmatprep.subr.mxu0 0.0
  %110 = vmatpush1.msra.mxu0 0.0
  %111 = vmatprep.subr.mxu0 0.0
  %112 = vmatpush1.msra.mxu0 0.0
  %113 = vmatprep.subr.mxu0 0.0
  %114 = vmatpush1.msra.mxu0 0.0
  %115 = vmatprep.mubr.f32.mxu0 %v49
  %116 = vmatmul.mubr.f32.gmra.mrb[0].mxu0 %v14
  %v117 = vpop.f32.mrb[0].mxu0
  %v118 = vadd.f32 %v45, %v117
  %v119 = vpop.f32.mrb[0].mxu0
  %120 = vdwg.mxu0
  %vm121 = vcmask 15360
  %122 = vst.msk [vmem:[%s3] sm:$0xff] %vm121, %v118
  // Predicated region
  $region14: #{tpu_custom_call.1} parent=0 // pred_check
    _
  $region15: #{tpu_custom_call.1} parent=0 // pred_check_branch
    %124 = sbr.rel (0) target = $region17
  $region16: #{tpu_custom_call.1} parent=0 // pred_region
    _
  $region17: #{tpu_custom_call.1} parent=0 // pred_fallthru
    _
  // Predicated region
  $region18: #{tpu_custom_call.1} parent=0 // pred_check
    _
  $region19: #{tpu_custom_call.1} parent=0 // pred_check_branch
    %126 = sbr.rel (0) target = $region21
  $region20: #{tpu_custom_call.1} parent=0 // pred_region
    _
  $region21: #{tpu_custom_call.1} parent=0 // pred_fallthru
    _

</llo_original>
